<compile_context>
chip_gen: v5e
topology: v5e:2x2
jax: 0.10.0
libtpu: 0.0.40
codegen_flags: <defaults>
</compile_context>

<pallas_src>
import functools

import jax
import jax.numpy as jnp
from jax.experimental import pallas as pl
from jax.experimental.pallas import tpu as pltpu

LANE = 128
SUBLANE = 8
BLOCK_ROWS = 4096  # (4096, 128) f32 tile = 2 MiB per stream per buffer


def _focal_bce_kernel(logits_ref, target_ref, out_ref, *, gamma, block_rows,
                      n_inner, needs_mask, num_full_blocks, full_rows,
                      lane_rem):
    o = pl.program_id(0)
    i = pl.program_id(1)
    block_idx = o * n_inner + i

    @pl.when(i == 0)
    def _():
        out_ref[...] = jnp.zeros_like(out_ref)

    eps = 1e-6
    # Upcast in-kernel; HBM traffic stays at the native (possibly narrow) dtype.
    x = logits_ref[...].astype(jnp.float32)
    t = target_ref[...].astype(jnp.float32)

    pt_raw = jnp.where(t == 1.0, x, 1.0 - x)
    pt = jnp.clip(pt_raw, eps, 1.0 - eps)
    one_minus_pt = 1.0 - pt
    if float(gamma) == 2.0:
        w = one_minus_pt * one_minus_pt          # VPU square, no float pow
    else:
        w = one_minus_pt ** gamma
    # log(where(t==1, x, 1-x) + eps) == where(t==1, log(x+eps), log(1-x+eps)):
    # a single EUP log per element.  alpha and the minus sign are folded into
    # the wrapper-side scale, so no extra multiplies here.
    loss = w * jnp.log(pt_raw + eps)

    def _accumulate(vals):
        # Tree-reduce the tile to one (8, 128) vreg (free relayout + VPU adds)
        # and accumulate into the resident output block.
        out_ref[...] += vals.reshape(-1, SUBLANE, LANE).sum(axis=0)[None]

    if needs_mask:
        # Only blocks that reach past the true element count need masking;
        # padding always sits at the end, so that is block_idx >= num_full_blocks.
        @pl.when(block_idx < num_full_blocks)
        def _():
            _accumulate(loss)

        @pl.when(block_idx >= num_full_blocks)
        def _():
            # Row-granular global index: no int32 overflow below 2^31 rows.
            row_ids = jax.lax.broadcasted_iota(
                jnp.int32, (block_rows, LANE), 0)
            g_row = block_idx * block_rows + row_ids
            valid = g_row < full_rows
            if lane_rem:
                lane_ids = jax.lax.broadcasted_iota(
                    jnp.int32, (block_rows, LANE), 1)
                valid = valid | ((g_row == full_rows) & (lane_ids < lane_rem))
            _accumulate(jnp.where(valid, loss, 0.0))
    else:
        _accumulate(loss)


def focal_bce_loss(logits, target, *, alpha=0.25, gamma=2.0, reduction="mean"):
    """Pallas implementation of FocalBCELoss.forward (reduction='mean').

    `logits`/`target` may be bf16 (recommended on v5e/v6e: halves HBM bytes);
    the kernel upcasts to f32 in VMEM.  Note: alpha/gamma/shape are baked in
    as Python constants, so distinct values trigger recompilation.
    """
    # TODO(synk): reduction='none' (elementwise loss tensor) not implemented.
    assert reduction == "mean", "only 'mean' reduction implemented in-kernel"
    orig_count = int(logits.size)

    flat_l = logits.reshape(-1)
    flat_t = target.reshape(-1)

    # Pad only when the element count isn't already a multiple of 8*128 so the
    # slab is (rows, 128) with rows % 8 == 0.
    slab = SUBLANE * LANE
    padded = pl.cdiv(orig_count, slab) * slab
    pad = padded - orig_count
    if pad:
        flat_l = jnp.pad(flat_l, (0, pad))
        flat_t = jnp.pad(flat_t, (0, pad))

    rows = padded // LANE
    l2 = flat_l.reshape(rows, LANE)
    t2 = flat_t.reshape(rows, LANE)

    block_rows = min(BLOCK_ROWS, rows)           # multiple of 8 by construction
    num_blocks = pl.cdiv(rows, block_rows)

    # Always give v7x's two TensorCores work when there is more than 1 block.
    n_outer = 2 if num_blocks >= 2 else 1
    n_inner = pl.cdiv(num_blocks, n_outer)
    last_block = num_blocks - 1

    if n_outer * n_inner > num_blocks:
        # Odd block count: the extra (o=1, i=n_inner-1) step re-reads the last
        # real block (clamped index) and is fully masked out in-kernel.
        def idx_map(o, i):
            return (jnp.minimum(o * n_inner + i, last_block), 0)
    else:
        def idx_map(o, i):
            return (o * n_inner + i, 0)

    elems_per_block = block_rows * LANE
    covered = n_outer * n_inner * elems_per_block
    # One static flag covers: (a) slab padding, (b) rows % block_rows != 0,
    # (c) the overhang block introduced by forcing n_outer == 2.
    needs_mask = covered != orig_count

    kernel = functools.partial(
        _focal_bce_kernel,
        gamma=float(gamma),
        block_rows=int(block_rows),
        n_inner=int(n_inner),
        needs_mask=bool(needs_mask),
        num_full_blocks=int(orig_count // elems_per_block),
        full_rows=int(orig_count // LANE),
        lane_rem=int(orig_count % LANE),
    )

    in_spec = pl.BlockSpec((block_rows, LANE), idx_map)

    partials = pl.pallas_call(
        kernel,
        out_shape=jax.ShapeDtypeStruct((n_outer, SUBLANE, LANE), jnp.float32),
        grid_spec=pltpu.PrefetchScalarGridSpec(
            num_scalar_prefetch=0,
            grid=(n_outer, n_inner),
            in_specs=[in_spec, in_spec],
            out_specs=pl.BlockSpec((1, SUBLANE, LANE), lambda o, i: (o, 0, 0)),
        ),
        compiler_params=pltpu.CompilerParams(
            dimension_semantics=("parallel", "arbitrary")),
    )(l2, t2)

    # alpha and the minus sign were factored out of the per-element math;
    # tiny cross-core/vreg reduction + mean scale happens here.
    return jnp.sum(partials) * (-float(alpha) / float(orig_count))


def _reference(logits, target, alpha=0.25, gamma=2.0):
    eps = 1e-6
    pt = jnp.where(target == 1, logits, 1 - logits)
    pt = jnp.clip(pt, eps, 1 - eps)
    w = alpha * (1 - pt) ** gamma
    loss = -w * jnp.where(target == 1, jnp.log(logits + eps),
                          jnp.log(1 - logits + eps))
    return loss.mean()


def _make_inputs(key, shape):
    k1, k2 = jax.random.split(key)
    logits = jax.nn.sigmoid(jax.random.normal(k1, shape, jnp.float32))
    target = (jax.random.uniform(k2, shape) > 0.5).astype(jnp.float32)
    return logits, target


if __name__ == "__main__":
    key = jax.random.PRNGKey(0)

    # 1) Small NCHW-shaped input, slab-aligned (fast path, no mask emitted).
    logits, target = _make_inputs(key, (2, 4, 16, 16))
    out = jax.block_until_ready(focal_bce_loss(logits, target))
    ref = _reference(logits, target)
    assert jnp.allclose(out, ref, rtol=1e-5, atol=1e-6), (out, ref)

    # 2) Ragged element count (exercises padding + gated tail mask).
    logits, target = _make_inputs(jax.random.PRNGKey(1), (3, 5, 7, 11))
    out = jax.block_until_ready(focal_bce_loss(logits, target))
    ref = _reference(logits, target)
    assert jnp.allclose(out, ref, rtol=1e-5, atol=1e-6), (out, ref)

    # 3) Odd block count (exercises the forced 2-way outer split, the clamped
    #    duplicate block and the ragged last real block).
    logits, target = _make_inputs(jax.random.PRNGKey(2), (2, 2, 512, 520))
    out = jax.block_until_ready(focal_bce_loss(logits, target))
    ref = _reference(logits, target)
    assert jnp.allclose(out, ref, rtol=1e-4, atol=1e-7), (out, ref)

    print("KERNEL_OK")
</pallas_src>

<mosaic_0001>
module attributes {stable_mosaic.version = 11 : i64} {
  func.func @_focal_bce_kernel(%arg0: i32, %arg1: i32, %arg2: memref<16x128xf32, #tpu.memory_space<vmem>>, %arg3: memref<16x128xf32, #tpu.memory_space<vmem>>, %arg4: memref<1x8x128xf32, #tpu.memory_space<vmem>>) attributes {dimension_semantics = [#tpu.dimension_semantics<parallel>, #tpu.dimension_semantics<arbitrary>], iteration_bounds = array<i64: 1, 1>, scalar_prefetch = 0 : i64, scratch_operands = 0 : i64, tpu.core_type = #tpu.core_type<tc>, window_params = [{transform_indices = @transform_0, window_bounds = array<i64: 16, 128>}, {transform_indices = @transform_1, window_bounds = array<i64: 16, 128>}, {transform_indices = @transform_2, window_bounds = array<i64: 1, 8, 128>}]} {
    %c0_i32 = arith.constant 0 : i32
    %0 = arith.cmpi eq, %arg1, %c0_i32 : i32
    %1 = arith.extui %0 : i1 to i32
    %c0_i32_0 = arith.constant 0 : i32
    %2 = arith.cmpi ne, %1, %c0_i32_0 : i32
    scf.if %2 {
      %cst_16 = arith.constant 0.000000e+00 : f32
      %27 = vector.broadcast %cst_16 : f32 to vector<1x8x128xf32>
      %c0_17 = arith.constant 0 : index
      %c0_18 = arith.constant 0 : index
      %c0_19 = arith.constant 0 : index
      %28 = vector.load %arg4[%c0_17, %c0_18, %c0_19] : memref<1x8x128xf32, #tpu.memory_space<vmem>>, vector<1x8x128xf32>
      tpu.vector_store %arg4[%c0_17, %c0_18, %c0_19], %27 {strides = array<i32>} : memref<1x8x128xf32, #tpu.memory_space<vmem>>, vector<1x8x128xf32>,
    } else {
    }
    %c0 = arith.constant 0 : index
    %c0_1 = arith.constant 0 : index
    %3 = vector.load %arg2[%c0, %c0_1] : memref<16x128xf32, #tpu.memory_space<vmem>>, vector<16x128xf32>
    %c0_2 = arith.constant 0 : index
    %c0_3 = arith.constant 0 : index
    %4 = vector.load %arg3[%c0_2, %c0_3] : memref<16x128xf32, #tpu.memory_space<vmem>>, vector<16x128xf32>
    %cst = arith.constant 1.000000e+00 : f32
    %5 = vector.broadcast %cst : f32 to vector<16x128xf32>
    %6 = arith.cmpf oeq, %4, %5 : vector<16x128xf32>
    %cst_4 = arith.constant 1.000000e+00 : f32
    %7 = vector.broadcast %cst_4 : f32 to vector<16x128xf32>
    %8 = arith.subf %7, %3 : vector<16x128xf32>
    %9 = arith.select %6, %3, %8 : vector<16x128xi1>, vector<16x128xf32>
    %cst_5 = arith.constant 9.99999997E-7 : f32
    %cst_6 = arith.constant 0.999998986 : f32
    %10 = vector.broadcast %cst_5 : f32 to vector<16x128xf32>
    %11 = arith.maximumf %10, %9 : vector<16x128xf32>
    %12 = vector.broadcast %cst_6 : f32 to vector<16x128xf32>
    %13 = arith.minimumf %12, %11 : vector<16x128xf32>
    %cst_7 = arith.constant 1.000000e+00 : f32
    %14 = vector.broadcast %cst_7 : f32 to vector<16x128xf32>
    %15 = arith.subf %14, %13 : vector<16x128xf32>
    %16 = arith.mulf %15, %15 : vector<16x128xf32>
    %cst_8 = arith.constant 9.99999997E-7 : f32
    %17 = vector.broadcast %cst_8 : f32 to vector<16x128xf32>
    %18 = arith.addf %9, %17 : vector<16x128xf32>
    %19 = math.log %18 : vector<16x128xf32>
    %20 = arith.mulf %16, %19 : vector<16x128xf32>
    %c0_9 = arith.constant 0 : index
    %c0_10 = arith.constant 0 : index
    %c0_11 = arith.constant 0 : index
    %21 = vector.load %arg4[%c0_9, %c0_10, %c0_11] : memref<1x8x128xf32, #tpu.memory_space<vmem>>, vector<1x8x128xf32>
    %22 = vector.shape_cast %20 : vector<16x128xf32> to vector<2x8x128xf32>
    %cst_12 = arith.constant dense<0.000000e+00> : vector<8x128xf32>
    %23 = vector.multi_reduction <add>, %22, %cst_12 [0] : vector<2x8x128xf32> to vector<8x128xf32>
    %24 = vector.shape_cast %23 : vector<8x128xf32> to vector<1x8x128xf32>
    %25 = arith.addf %21, %24 : vector<1x8x128xf32>
    %c0_13 = arith.constant 0 : index
    %c0_14 = arith.constant 0 : index
    %c0_15 = arith.constant 0 : index
    %26 = vector.load %arg4[%c0_13, %c0_14, %c0_15] : memref<1x8x128xf32, #tpu.memory_space<vmem>>, vector<1x8x128xf32>
    tpu.vector_store %arg4[%c0_13, %c0_14, %c0_15], %25 {strides = array<i32>} : memref<1x8x128xf32, #tpu.memory_space<vmem>>, vector<1x8x128xf32>,
    return
  }
  func.func @transform_0(%arg0: i32, %arg1: i32) -> (i32, i32) {
    %c1_i32 = arith.constant 1 : i32
    %0 = arith.muli %arg0, %c1_i32 : i32
    %1 = arith.addi %0, %arg1 : i32
    %c0_i32 = arith.constant 0 : i32
    %c0_i32_0 = arith.constant 0 : i32
    return %1, %c0_i32 : i32, i32
  }
  func.func @transform_1(%arg0: i32, %arg1: i32) -> (i32, i32) {
    %c1_i32 = arith.constant 1 : i32
    %0 = arith.muli %arg0, %c1_i32 : i32
    %1 = arith.addi %0, %arg1 : i32
    %c0_i32 = arith.constant 0 : i32
    %c0_i32_0 = arith.constant 0 : i32
    return %1, %c0_i32 : i32, i32
  }
  func.func @transform_2(%arg0: i32, %arg1: i32) -> (i32, i32, i32) {
    %c0_i32 = arith.constant 0 : i32
    %c0_i32_0 = arith.constant 0 : i32
    %c0_i32_1 = arith.constant 0 : i32
    return %arg0, %c0_i32, %c0_i32_0 : i32, i32, i32
  }
}

</mosaic_0001>

<llo_original>
// kernel: tpu_custom_call.1
$region0: #{tpu_custom_call.1}
  #allocation0 [shape = 'u32[]', space=smem, size = 0x4, offset = 0x4, fixed_abs, tag = 'smem constant byte address 0x4 - core index']
  #allocation1 [shape = 'u32[72,128]{1,0:T(1,128)}', space=vmem, size = 0x9000, scoped, tag = 'internal scratch']
  %s0 = inlined_call_operand.hbm [shape: f32[16,128], index: 0, kind: input, shape index: {}]
  %s1 = inlined_call_operand.hbm [shape: f32[16,128], index: 1, kind: input, shape index: {}]
  %s2 = inlined_call_operand.hbm [shape: f32[1,8,128], index: 2, kind: output, shape index: {}]
  %s3 = sld [smem:[#allocation0]]
  $region30: #{tpu_custom_call.1} parent=0
    _
  %s5 = ssub.s32 1, %s3
  %s6 = scalar_select 0, %s5, %s3
  $region1: #{tpu_custom_call.1} parent=0
    #allocation2 [shape = 'u8[8192]{0}', space=vmem, size = 0x2000, scoped, tag = 'input window, operand 0, single buffered']
    #allocation3 [shape = 's32[1]{0}', space=sflag, size = 0x4, scoped, tag = 'scoped memory for tpu_custom_call.1']
    #allocation4 [shape = 's32[1]{0}', space=sflag, size = 0x4, scoped, tag = 'scoped memory for tpu_custom_call.1']
    #allocation5 [shape = 'u8[8192]{0}', space=vmem, size = 0x2000, scoped, tag = 'input window, operand 1, single buffered']
    #allocation6 [shape = 's32[1]{0}', space=sflag, size = 0x4, scoped, tag = 'scoped memory for tpu_custom_call.1']
    #allocation7 [shape = 'u8[4096]{0}', space=vmem, size = 0x1000, scoped, tag = 'output window, operand 0, single buffered']
    %7 = vsyncpa [#allocation3], 0
    %8 = vsyncpa [#allocation6], 0
    %9 = vsyncpa [#allocation4], 0
    // Predicated region
    $region2: #{tpu_custom_call.1} parent=1 // pred_check
      _
    $region3: #{tpu_custom_call.1} parent=1 // pred_check_branch
      %11 = sbr.rel (0) target = $region5
    $region4: #{tpu_custom_call.1} parent=1 // pred_region
      %s12 = sadd.s32 0, 0
      %s13 = smul.u32 2, %s12
      %15 = vsyncadd [#allocation3], 0
      %s16 = smul.addr %s13, 8
      %s17 = scalar_lea.hbm %s0, %s16
      %s18 = sshll.u32 %s17, 4
      %s19 = int_to_ptr.hbm [resolvable:$true] %s18
      %s20 = sshll.u32 [#allocation2], 4
      %s21 = int_to_ptr.vmem [resolvable:$true] %s20
      %26 = dma.hbm_to_vmem [thread:$0]  %s19, 256, %s21, [#allocation3], 128, 128, 8
    $region5: #{tpu_custom_call.1} parent=1 // pred_fallthru
      _
    // Predicated region
    $region6: #{tpu_custom_call.1} parent=1 // pred_check
      _
    $region7: #{tpu_custom_call.1} parent=1 // pred_check_branch
      %28 = sbr.rel (0) target = $region9
    $region8: #{tpu_custom_call.1} parent=1 // pred_region
      %s29 = sadd.s32 0, 0
      %s30 = smul.u32 2, %s29
      %32 = vsyncadd [#allocation6], 0
      %s33 = smul.addr %s30, 8
      %s34 = scalar_lea.hbm %s1, %s33
      %s35 = sshll.u32 %s34, 4
      %s36 = int_to_ptr.hbm [resolvable:$true] %s35
      %s37 = sshll.u32 [#allocation5], 4
      %s38 = int_to_ptr.vmem [resolvable:$true] %s37
      %43 = dma.hbm_to_vmem [thread:$0]  %s36, 256, %s38, [#allocation6], 128, 128, 8
    $region9: #{tpu_custom_call.1} parent=1 // pred_fallthru
      _
    // Predicated region
    $region10: #{tpu_custom_call.1} parent=1 // pred_check
      _
    $region11: #{tpu_custom_call.1} parent=1 // pred_check_branch
      %45 = sbr.rel (0) target = $region13
    $region12: #{tpu_custom_call.1} parent=1 // pred_region
      %47 = dma.done [#allocation3], 256
    $region13: #{tpu_custom_call.1} parent=1 // pred_fallthru
      _
    // Predicated region
    $region14: #{tpu_custom_call.1} parent=1 // pred_check
      _
    $region15: #{tpu_custom_call.1} parent=1 // pred_check_branch
      %49 = sbr.rel (0) target = $region17
    $region16: #{tpu_custom_call.1} parent=1 // pred_region
      %51 = dma.done [#allocation6], 256
    $region17: #{tpu_custom_call.1} parent=1 // pred_fallthru
      _
    %s52 = sadd.s32 0, 0
    %s53 = smul.u32 2, %s52
    %s54 = sadd.s32 0, 0
    %s55 = smul.u32 2, %s54
    %p56 = scmp.eq.s32.totalorder 0, 0
    // Predicated region
    $region18: #{tpu_custom_call.1} parent=1 // pred_check
      %p57 = pneg %p56
    $region19: #{tpu_custom_call.1} parent=1 // pred_check_branch
      %59 = sbr.rel (%p57) target = $region21
    $region20: #{tpu_custom_call.1} parent=1 // pred_region
      %60 = vst [vmem:[#allocation7] sm:$0xff] 0.0
    $region21: #{tpu_custom_call.1} parent=1 // pred_fallthru
      _
    %v61 = vld [vmem:[#allocation2] sm:$0xff]
    %v62 = vld [vmem:[#allocation2 + $0x8] sm:$0xff]
    %v63 = vld [vmem:[#allocation5] sm:$0xff]
    %v64 = vld [vmem:[#allocation5 + $0x8] sm:$0xff]
    %vm65 = vcmp.eq.f32.partialorder %v63, 1.0
    %vm66 = vcmp.eq.f32.partialorder %v64, 1.0
    %v67 = vsub.f32 1.0, %v61
    %v68 = vsub.f32 1.0, %v62
    %v69 = vsel %vm65, %v61, %v67
    %v70 = vsel %vm66, %v62, %v68
    %v71 = vmax.f32 %v69, 1e-06
    %v72 = vmax.f32 %v70, 1e-06
    %v73 = vmin.f32 %v71, 0.999999
    %v74 = vmin.f32 %v72, 0.999999
    %v75 = vsub.f32 1.0, %v73
    %v76 = vsub.f32 1.0, %v74
    %v77 = vmul.f32 %v75, %v75
    %v78 = vmul.f32 %v76, %v76
    %v79 = vadd.f32 %v69, 1e-06
    %v80 = vadd.f32 %v70, 1e-06
    %v81 = vlog2.pop %v79
    %v82 = vmul.f32 %v81, 0.6931472
    %v83 = vlog2.pop %v80
    %v84 = vmul.f32 %v83, 0.6931472
    %v85 = vmul.f32 %v77, %v82
    %v86 = vmul.f32 %v78, %v84
    %v87 = vld [vmem:[#allocation7] sm:$0xff]
    %v88 = vadd.f32 %v85, %v86
    %v89 = vadd.f32 %v87, %v88
    %90 = vst [vmem:[#allocation7] sm:$0xff] %v89
    // Predicated region
    $region22: #{tpu_custom_call.1} parent=1 // pred_check
      _
    $region23: #{tpu_custom_call.1} parent=1 // pred_check_branch
      %92 = sbr.rel (0) target = $region25
    $region24: #{tpu_custom_call.1} parent=1 // pred_region
      %94 = vsyncadd [#allocation4], 0
      %s96 = sshll.u32 [#allocation7], 4
      %s97 = int_to_ptr.vmem [resolvable:$true] %s96
      %s98 = sshll.u32 %s2, 4
      %s99 = int_to_ptr.hbm [resolvable:$true] %s98
      %101 = dma.vmem_to_hbm [thread:$0]  %s97, 128, %s99, [#allocation4]
    $region25: #{tpu_custom_call.1} parent=1 // pred_fallthru
      _
    // Predicated region
    $region26: #{tpu_custom_call.1} parent=1 // pred_check
      _
    $region27: #{tpu_custom_call.1} parent=1 // pred_check_branch
      %103 = sbr.rel (0) target = $region29
    $region28: #{tpu_custom_call.1} parent=1 // pred_region
      %105 = dma.done [#allocation4], 128
    $region29: #{tpu_custom_call.1} parent=1 // pred_fallthru
      _
    %106 = vsyncpa [#allocation3], 1
    %107 = vsyncpa [#allocation6], 1
    %108 = vsyncpa [#allocation4], 1

</llo_original>
